<compile_context>
chip_gen: v5e
topology: v5e:2x2
jax: 0.10.0
libtpu: 0.0.40
codegen_flags: <defaults>
</compile_context>

<pallas_src>
import functools
import math

import jax
import jax.numpy as jnp
from jax.experimental import pallas as pl
from jax.experimental.pallas import tpu as pltpu

_MIB = 1024 * 1024


def _round_up(x, m):
    return ((x + m - 1) // m) * m


def _spec(shape, index_map, *, single_buffer=False):
    """BlockSpec; grid/reduction-invariant operands get a single VMEM buffer."""
    if single_buffer:
        try:
            return pl.BlockSpec(shape, index_map, pipeline_mode=pl.Buffered(1))
        except Exception:  # older jax without pipeline_mode/Buffered -> default buffering
            pass
    return pl.BlockSpec(shape, index_map)


def _vmem_budget():
    """Usable scoped-VMEM budget, with headroom below physical VMEM (v7x: 64 MiB/TC)."""
    cap = 64 * _MIB
    try:
        cap = int(pltpu.get_tpu_info().vmem_capacity_bytes)
    except Exception:
        pass
    return min(int(cap * 0.85), cap - 8 * _MIB)


def _pick_hidden_tile(hidden, target):
    """Largest 128-aligned divisor of `hidden` near `target` (avoid collapsing to 128)."""
    if hidden % 128 != 0 or hidden <= target:
        return hidden
    divs = [d for d in range(128, hidden + 1, 128) if hidden % d == 0]
    le = [d for d in divs if d <= target]
    if le and (le[-1] >= 512 or le[-1] == hidden):
        return le[-1]
    ge = [d for d in divs if d > target]
    if ge and ge[0] <= 2 * target:
        return ge[0]
    return le[-1] if le else hidden


def _apply_dropout(out, seed_ref, dropout_rate, row_tile):
    # Hardware PRNG mask + 1/(1-p) scaling; unique stream per row tile.
    pltpu.prng_seed(seed_ref[0] + row_tile)
    bits = pltpu.bitcast(pltpu.prng_random_bits(out.shape), jnp.uint32)
    thresh = jnp.uint32(min(int(round(dropout_rate * 4294967296.0)), 4294967295))
    keep = bits >= thresh
    return jnp.where(keep, out * (1.0 / (1.0 - dropout_rate)), 0.0)


def _ffn_resident_kernel(seed_ref, x_ref, w1_ref, b1_ref, w2_ref, b2_ref, o_ref, *,
                         dropout_rate, training, compute_dtype):
    # x_ref: (tm, C) input dtype; w1_ref: (C, H) bf16; b1_ref: (1, H) f32;
    # w2_ref: (H, Cp) bf16; b2_ref: (1, Cp) f32; o_ref: (tm, Cp).  Weights are VMEM-resident.
    x = x_ref[...].astype(compute_dtype)                       # VPU cast hides under the MXU
    h = jnp.dot(x, w1_ref[...], preferred_element_type=jnp.float32)
    h = jnp.maximum(h + b1_ref[...], 0.0)                      # fused bias + ReLU in f32
    out = jnp.dot(h.astype(w2_ref.dtype), w2_ref[...],
                  preferred_element_type=jnp.float32) + b2_ref[...]
    if training and dropout_rate > 0.0:
        out = _apply_dropout(out, seed_ref, dropout_rate, pl.program_id(0))
    o_ref[...] = out.astype(o_ref.dtype)


def _ffn_stream_kernel(seed_ref, x_ref, w1_ref, b1_ref, w2_ref, b2_ref, o_ref, *scratch,
                       dropout_rate, training, compute_dtype):
    # Hidden dim streamed along grid axis 1.  Accumulator is either the f32 output tile
    # itself (resident across k) or a dedicated f32 VMEM scratch for narrow out dtypes.
    acc_ref = scratch[0] if scratch else o_ref
    k = pl.program_id(1)

    @pl.when(k == 0)
    def _init():
        acc_ref[...] = jnp.zeros_like(acc_ref)

    x = x_ref[...].astype(compute_dtype)
    h = jnp.dot(x, w1_ref[...], preferred_element_type=jnp.float32)
    h = jnp.maximum(h + b1_ref[...], 0.0)
    acc_ref[...] += jnp.dot(h.astype(w2_ref.dtype), w2_ref[...],
                            preferred_element_type=jnp.float32)

    @pl.when(k == pl.num_programs(1) - 1)
    def _finalize():
        out = acc_ref[...] + b2_ref[...]
        if training and dropout_rate > 0.0:
            out = _apply_dropout(out, seed_ref, dropout_rate, pl.program_id(0))
        o_ref[...] = out.astype(o_ref.dtype)


def feed_forward(x, w1, b1, w2, b2, *, tm=512, th=1024,
                 dropout_rate=0.3, training=False, seed=0,
                 compute_dtype=jnp.bfloat16, core_parallel=False,
                 force_streaming=False):
    """y = dropout(relu(x @ w1 + b1) @ w2 + b2); x: (..., n_embd), returns same shape/dtype.

    w1: (n_embd, 4*n_embd), w2: (4*n_embd, n_embd) (transposed vs torch).  Store weights in
    `compute_dtype` (bf16) so no per-call conversion pass runs (see init_params).
    """
    orig_shape = x.shape
    out_dtype = x.dtype
    c_in = orig_shape[-1]
    hidden = w1.shape[1]
    assert w1.shape == (c_in, hidden) and w2.shape == (hidden, c_in)

    x2d = x.reshape(-1, c_in)          # no wrapper-side dtype cast: done on the VPU in-kernel
    M = x2d.shape[0]

    # Lane-pad output features so the final stores are unmasked, lane-dense vst.
    c_pad = _round_up(c_in, 128)

    w1c = w1 if w1.dtype == compute_dtype else w1.astype(compute_dtype)
    w2c = w2 if w2.dtype == compute_dtype else w2.astype(compute_dtype)
    if c_pad != c_in:
        w2c = jnp.pad(w2c, ((0, 0), (0, c_pad - c_in)))
    b1_2d = b1.reshape(1, hidden).astype(jnp.float32)
    b2_2d = b2.reshape(1, c_in).astype(jnp.float32)
    if c_pad != c_in:
        b2_2d = jnp.pad(b2_2d, ((0, 0), (0, c_pad - c_in)))
    seed_arr = jnp.asarray([seed], dtype=jnp.int32)

    x_b = x2d.dtype.itemsize
    w_b = jnp.dtype(compute_dtype).itemsize
    out_b = jnp.dtype(out_dtype).itemsize
    budget = _vmem_budget()
    acc_in_out = out_dtype == jnp.float32   # accumulate directly into resident output tile

    def resident_est(tm_):
        return (2 * tm_ * c_in * x_b                 # x tile (double-buffered)
                + c_in * hidden * w_b                # W1 resident (single buffer)
                + hidden * c_pad * w_b               # W2 resident (single buffer)
                + 8 * hidden * 4 + 8 * c_pad * 4     # biases (sublane-padded)
                + 2 * tm_ * c_pad * out_b            # out tile (double-buffered)
                + tm_ * hidden * (4 + w_b)           # h in f32 + bf16 copy
                + 2 * tm_ * c_pad * 4)               # f32 epilogue temps

    def stream_est(tm_, th_):
        return (tm_ * c_in * x_b                     # x tile (single buffer, k-invariant)
                + 2 * c_in * th_ * w_b               # W1 column tile
                + 2 * th_ * c_pad * w_b              # W2 row tile
                + 2 * 8 * th_ * 4 + 8 * c_pad * 4    # b1 / b2
                + tm_ * c_pad * out_b                # out tile (single buffer, resident over k)
                + tm_ * th_ * (4 + w_b)              # h in f32 + bf16 copy
                + (0 if acc_in_out else tm_ * c_pad * 4)
                + tm_ * c_pad * 4)                   # f32 epilogue temp

    # Row tile: large (amortizes streamed weight bytes), sublane-aligned, clamped for tiny
    # inputs; ragged tails handled by zero-padding + slicing (no divisibility assert).
    tm = max(8, min(tm, _round_up(M, 8)))
    tm = _round_up(tm, 8)

    use_resident = (not force_streaming) and resident_est(tm) <= budget
    if not use_resident:
        th = _pick_hidden_tile(hidden, min(th, hidden))
        while stream_est(tm, th) > budget and tm > 128:
            tm = _round_up(max(tm // 2, 128), 8)

    m_pad = _round_up(M, tm)
    if m_pad != M:
        x2d = jnp.pad(x2d, ((0, m_pad - M), (0, 0)))

    if use_resident:
        grid = (m_pad // tm,)
        in_specs = [
            _spec((tm, c_in), lambda i, s: (i, 0)),
            _spec((c_in, hidden), lambda i, s: (0, 0), single_buffer=True),   # W1 resident
            _spec((1, hidden), lambda i, s: (0, 0), single_buffer=True),      # b1 resident
            _spec((hidden, c_pad), lambda i, s: (0, 0), single_buffer=True),  # W2 resident
            _spec((1, c_pad), lambda i, s: (0, 0), single_buffer=True),       # b2 resident
        ]
        out_spec = pl.BlockSpec((tm, c_pad), lambda i, s: (i, 0))
        scratch = []
        kernel = functools.partial(_ffn_resident_kernel,
                                   dropout_rate=float(dropout_rate),
                                   training=bool(training),
                                   compute_dtype=compute_dtype)
        dims = ("parallel",)
        est = resident_est(tm)
    else:
        grid = (m_pad // tm, hidden // th)
        in_specs = [
            _spec((tm, c_in), lambda i, k, s: (i, 0), single_buffer=True),    # x (k-invariant)
            _spec((c_in, th), lambda i, k, s: (0, k)),                        # W1 column tile
            _spec((1, th), lambda i, k, s: (0, k)),                           # b1 tile
            _spec((th, c_pad), lambda i, k, s: (k, 0)),                       # W2 row tile
            _spec((1, c_pad), lambda i, k, s: (0, 0), single_buffer=True),    # b2 (invariant)
        ]
        out_spec = _spec((tm, c_pad), lambda i, k, s: (i, 0), single_buffer=True)
        scratch = [] if acc_in_out else [pltpu.VMEM((tm, c_pad), jnp.float32)]
        kernel = functools.partial(_ffn_stream_kernel,
                                   dropout_rate=float(dropout_rate),
                                   training=bool(training),
                                   compute_dtype=compute_dtype)
        dims = ("parallel", "arbitrary")
        est = stream_est(tm, th)

    # Row-tile axis can be split across TensorCores; CORE_PARALLEL is what actually shards
    # it on v7x's 2-TC megacore (plain "parallel" barely changes codegen). Default off.
    if core_parallel and hasattr(pltpu, "CORE_PARALLEL"):
        dims = (pltpu.CORE_PARALLEL,) + tuple(dims[1:])

    vmem_limit = int(min(budget, max(32 * _MIB, int(1.5 * est))))

    out = pl.pallas_call(
        kernel,
        out_shape=jax.ShapeDtypeStruct((m_pad, c_pad), out_dtype),
        grid_spec=pltpu.PrefetchScalarGridSpec(
            num_scalar_prefetch=1,                    # dropout seed (SMEM)
            grid=grid,
            in_specs=in_specs,
            out_specs=out_spec,
            scratch_shapes=scratch,
        ),
        compiler_params=pltpu.CompilerParams(
            dimension_semantics=dims,
            vmem_limit_bytes=vmem_limit,
        ),
    )(seed_arr, x2d, w1c, b1_2d, w2c, b2_2d)

    if m_pad != M or c_pad != c_in:
        out = out[:M, :c_in]
    return out.reshape(orig_shape)


def init_params(key, n_embd, weight_dtype=jnp.bfloat16):
    """PyTorch-Linear-style init; weights stored transposed (in, out) and pre-cast to the
    MXU compute dtype ONCE here (no per-call f32->bf16 conversion pass)."""
    hidden = 4 * n_embd
    k1, k2, k3, k4 = jax.random.split(key, 4)
    lim1 = 1.0 / math.sqrt(n_embd)
    lim2 = 1.0 / math.sqrt(hidden)
    w1 = jax.random.uniform(k1, (n_embd, hidden), jnp.float32, -lim1, lim1).astype(weight_dtype)
    b1 = jax.random.uniform(k2, (hidden,), jnp.float32, -lim1, lim1)
    w2 = jax.random.uniform(k3, (hidden, n_embd), jnp.float32, -lim2, lim2).astype(weight_dtype)
    b2 = jax.random.uniform(k4, (n_embd,), jnp.float32, -lim2, lim2)
    return w1, b1, w2, b2


if __name__ == "__main__":
    key = jax.random.PRNGKey(0)
    batch, seq, n_embd = 2, 8, 128

    kx, kx2, kp = jax.random.split(key, 3)
    x = jax.random.normal(kx, (batch, seq, n_embd), dtype=jnp.float32)
    w1, b1, w2, b2 = init_params(kp, n_embd)            # bf16 weights (cast once at init)

    # f32 reference using the same (bf16-stored) weights; kernel runs bf16 on the MXU with
    # f32 accumulation, so only small rounding diffs remain.
    w1f, w2f = w1.astype(jnp.float32), w2.astype(jnp.float32)

    def ref_fn(xv):
        return jnp.maximum(xv @ w1f + b1, 0.0) @ w2f + b2

    # 1) Default path: weights VMEM-resident, single fused pass per row tile (eval dropout).
    out = jax.block_until_ready(feed_forward(x, w1, b1, w2, b2))
    assert out.shape == x.shape and out.dtype == x.dtype
    assert jnp.allclose(out, ref_fn(x), atol=3e-2, rtol=3e-2), "resident path mismatch"

    # 2) Streaming fallback path (hidden dim tiled + in-place f32 accumulation), with a
    #    ragged row count to exercise zero-padding / slicing.
    x2 = jax.random.normal(kx2, (batch, seq + 2, n_embd), dtype=jnp.float32)
    out2 = jax.block_until_ready(
        feed_forward(x2, w1, b1, w2, b2, force_streaming=True, th=128))
    assert out2.shape == x2.shape and out2.dtype == x2.dtype
    assert jnp.allclose(out2, ref_fn(x2), atol=3e-2, rtol=3e-2), "streaming path mismatch"

    print("KERNEL_OK")
</pallas_src>

<mosaic_0001>
module attributes {stable_mosaic.version = 11 : i64} {
  func.func @_ffn_resident_kernel(%arg0: i32, %arg1: memref<1xi32, #tpu.memory_space<smem>>, %arg2: memref<16x128xf32, #tpu.memory_space<vmem>>, %arg3: memref<128x512xbf16, #tpu.memory_space<vmem>>, %arg4: memref<1x512xf32, #tpu.memory_space<vmem>>, %arg5: memref<512x128xbf16, #tpu.memory_space<vmem>>, %arg6: memref<1x128xf32, #tpu.memory_space<vmem>>, %arg7: memref<16x128xf32, #tpu.memory_space<vmem>>) attributes {dimension_semantics = [#tpu.dimension_semantics<parallel>], iteration_bounds = array<i64: 1>, scalar_prefetch = 1 : i64, scratch_operands = 0 : i64, tpu.core_type = #tpu.core_type<tc>, window_params = [{transform_indices = @transform_0, window_bounds = array<i64: 16, 128>}, {pipeline_mode = #tpu.pipeline_mode<synchronous>, transform_indices = @transform_1, window_bounds = array<i64: 128, 512>}, {pipeline_mode = #tpu.pipeline_mode<synchronous>, transform_indices = @transform_2, window_bounds = array<i64: 1, 512>}, {pipeline_mode = #tpu.pipeline_mode<synchronous>, transform_indices = @transform_3, window_bounds = array<i64: 512, 128>}, {pipeline_mode = #tpu.pipeline_mode<synchronous>, transform_indices = @transform_4, window_bounds = array<i64: 1, 128>}, {transform_indices = @transform_5, window_bounds = array<i64: 16, 128>}]} {
    %c0 = arith.constant 0 : index
    %c0_0 = arith.constant 0 : index
    %0 = vector.load %arg2[%c0, %c0_0] : memref<16x128xf32, #tpu.memory_space<vmem>>, vector<16x128xf32>
    %1 = arith.truncf %0 : vector<16x128xf32> to vector<16x128xbf16>
    %c0_1 = arith.constant 0 : index
    %c0_2 = arith.constant 0 : index
    %2 = vector.load %arg3[%c0_1, %c0_2] : memref<128x512xbf16, #tpu.memory_space<vmem>>, vector<128x512xbf16>
    %cst = arith.constant dense<0.000000e+00> : vector<16x512xf32>
    %3 = tpu.matmul %1, %2, %cst {dimension_numbers = #tpu.dot_dimension_numbers<[1], [0], [0], [1], [0, 0, 1, 1], [], []>} : vector<16x128xbf16>, vector<128x512xbf16>, vector<16x512xf32> -> vector<16x512xf32>
    %c0_3 = arith.constant 0 : index
    %c0_4 = arith.constant 0 : index
    %4 = vector.load %arg4[%c0_3, %c0_4] : memref<1x512xf32, #tpu.memory_space<vmem>>, vector<1x512xf32>
    %5 = vector.broadcast %4 : vector<1x512xf32> to vector<16x512xf32>
    %6 = arith.addf %3, %5 : vector<16x512xf32>
    %cst_5 = arith.constant 0.000000e+00 : f32
    %7 = vector.broadcast %cst_5 : f32 to vector<16x512xf32>
    %8 = arith.maximumf %6, %7 : vector<16x512xf32>
    %9 = arith.truncf %8 : vector<16x512xf32> to vector<16x512xbf16>
    %c0_6 = arith.constant 0 : index
    %c0_7 = arith.constant 0 : index
    %10 = vector.load %arg5[%c0_6, %c0_7] : memref<512x128xbf16, #tpu.memory_space<vmem>>, vector<512x128xbf16>
    %cst_8 = arith.constant dense<0.000000e+00> : vector<16x128xf32>
    %11 = tpu.matmul %9, %10, %cst_8 {dimension_numbers = #tpu.dot_dimension_numbers<[1], [0], [0], [1], [0, 0, 1, 1], [], []>} : vector<16x512xbf16>, vector<512x128xbf16>, vector<16x128xf32> -> vector<16x128xf32>
    %c0_9 = arith.constant 0 : index
    %c0_10 = arith.constant 0 : index
    %12 = vector.load %arg6[%c0_9, %c0_10] : memref<1x128xf32, #tpu.memory_space<vmem>>, vector<1x128xf32>
    %13 = vector.broadcast %12 : vector<1x128xf32> to vector<16x128xf32>
    %14 = arith.addf %11, %13 : vector<16x128xf32>
    %c0_11 = arith.constant 0 : index
    %c0_12 = arith.constant 0 : index
    %15 = vector.load %arg7[%c0_11, %c0_12] : memref<16x128xf32, #tpu.memory_space<vmem>>, vector<16x128xf32>
    tpu.vector_store %arg7[%c0_11, %c0_12], %14 {strides = array<i32>} : memref<16x128xf32, #tpu.memory_space<vmem>>, vector<16x128xf32>,
    return
  }
  func.func @transform_0(%arg0: i32, %arg1: memref<1xi32, #tpu.memory_space<smem>>) -> (i32, i32) {
    %c0_i32 = arith.constant 0 : i32
    %c0_i32_0 = arith.constant 0 : i32
    return %arg0, %c0_i32 : i32, i32
  }
  func.func @transform_1(%arg0: i32, %arg1: memref<1xi32, #tpu.memory_space<smem>>) -> (i32, i32) {
    %c0_i32 = arith.constant 0 : i32
    %c0_i32_0 = arith.constant 0 : i32
    %c0_i32_1 = arith.constant 0 : i32
    return %c0_i32, %c0_i32_0 : i32, i32
  }
  func.func @transform_2(%arg0: i32, %arg1: memref<1xi32, #tpu.memory_space<smem>>) -> (i32, i32) {
    %c0_i32 = arith.constant 0 : i32
    %c0_i32_0 = arith.constant 0 : i32
    %c0_i32_1 = arith.constant 0 : i32
    return %c0_i32, %c0_i32_0 : i32, i32
  }
  func.func @transform_3(%arg0: i32, %arg1: memref<1xi32, #tpu.memory_space<smem>>) -> (i32, i32) {
    %c0_i32 = arith.constant 0 : i32
    %c0_i32_0 = arith.constant 0 : i32
    %c0_i32_1 = arith.constant 0 : i32
    return %c0_i32, %c0_i32_0 : i32, i32
  }
  func.func @transform_4(%arg0: i32, %arg1: memref<1xi32, #tpu.memory_space<smem>>) -> (i32, i32) {
    %c0_i32 = arith.constant 0 : i32
    %c0_i32_0 = arith.constant 0 : i32
    %c0_i32_1 = arith.constant 0 : i32
    return %c0_i32, %c0_i32_0 : i32, i32
  }
  func.func @transform_5(%arg0: i32, %arg1: memref<1xi32, #tpu.memory_space<smem>>) -> (i32, i32) {
    %c0_i32 = arith.constant 0 : i32
    %c0_i32_0 = arith.constant 0 : i32
    return %arg0, %c0_i32 : i32, i32
  }
}

</mosaic_0001>

<llo_original>
// kernel: tpu_custom_call.1
$region0: #{tpu_custom_call.1}
  #allocation0 [shape = 'u32[]', space=smem, size = 0x4, offset = 0x4, fixed_abs, tag = 'smem constant byte address 0x4 - core index']
  #allocation1 [shape = 'u32[72,128]{1,0:T(1,128)}', space=vmem, size = 0x9000, scoped, tag = 'internal scratch']
  #allocation2 [shape = 's32[1]{0}', space=sflag, size = 0x4, scoped, tag = 'scoped memory for tpu_custom_call.1']
  #allocation3 [shape = 's32[1]{0:T(128)S(6)}', space=smem, size = 0x200, scoped, tag = 'prefetched SMEM operand 0']
  %s0 = inlined_call_operand.<no memory space> [shape: s32[1], index: 0, kind: input, shape index: {}]
  %s1 = inlined_call_operand.hbm [shape: f32[16,128], index: 1, kind: input, shape index: {}]
  %s2 = inlined_call_operand.hbm [shape: bf16[128,512], index: 2, kind: input, shape index: {}]
  %s3 = inlined_call_operand.hbm [shape: f32[1,512], index: 3, kind: input, shape index: {}]
  %s4 = inlined_call_operand.hbm [shape: bf16[512,128], index: 4, kind: input, shape index: {}]
  %s5 = inlined_call_operand.vmem [shape: f32[1,128], index: 5, kind: input, shape index: {}]
  %s6 = inlined_call_operand.hbm [shape: f32[16,128], index: 6, kind: output, shape index: {}]
  %s7 = sld [smem:[#allocation0]]
  $region46: #{tpu_custom_call.1} parent=0
    _
  %s9 = ssub.s32 1, %s7
  %s10 = scalar_select 0, %s9, %s7
  %11 = sst [smem:[#allocation3]] %s0
  $region1: #{tpu_custom_call.1} parent=0
    #allocation4 [shape = 'u8[8192]{0}', space=vmem, size = 0x2000, scoped, tag = 'input window, operand 1, single buffered']
    #allocation5 [shape = 's32[1]{0}', space=sflag, size = 0x4, scoped, tag = 'scoped memory for tpu_custom_call.1']
    #allocation6 [shape = 's32[1]{0}', space=sflag, size = 0x4, scoped, tag = 'scoped memory for tpu_custom_call.1']
    #allocation7 [shape = 'u8[131072]{0}', space=vmem, size = 0x20000, scoped, tag = 'input window, operand 2, single buffered']
    #allocation8 [shape = 's32[1]{0}', space=sflag, size = 0x4, scoped, tag = 'scoped memory for tpu_custom_call.1']
    #allocation9 [shape = 'u8[2048]{0}', space=vmem, size = 0x800, scoped, tag = 'input window, operand 3, single buffered']
    #allocation10 [shape = 'u8[131072]{0}', space=vmem, size = 0x20000, scoped, tag = 'input window, operand 4, single buffered']
    #allocation11 [shape = 's32[1]{0}', space=sflag, size = 0x4, scoped, tag = 'scoped memory for tpu_custom_call.1']
    #allocation12 [shape = 'u8[8192]{0}', space=vmem, size = 0x2000, scoped, tag = 'output window, operand 0, single buffered']
    %12 = vsyncpa [#allocation5], 0
    %13 = vsyncpa [#allocation8], 0
    %14 = vsyncpa [#allocation11], 0
    %15 = vsyncpa [#allocation6], 0
    // Predicated region
    $region2: #{tpu_custom_call.1} parent=1 // pred_check
      _
    $region3: #{tpu_custom_call.1} parent=1 // pred_check_branch
      %17 = sbr.rel (0) target = $region5
    $region4: #{tpu_custom_call.1} parent=1 // pred_region
      %19 = vsyncadd [#allocation5], 0
      %s20 = sshll.u32 %s1, 4
      %s21 = int_to_ptr.hbm [resolvable:$true] %s20
      %s22 = sshll.u32 [#allocation4], 4
      %s23 = int_to_ptr.vmem [resolvable:$true] %s22
      %28 = dma.hbm_to_vmem [thread:$0]  %s21, 256, %s23, [#allocation5], 128, 128, 8
    $region5: #{tpu_custom_call.1} parent=1 // pred_fallthru
      _
    // Predicated region
    $region6: #{tpu_custom_call.1} parent=1 // pred_check
      _
    $region7: #{tpu_custom_call.1} parent=1 // pred_check_branch
      %30 = sbr.rel (0) target = $region9
    $region8: #{tpu_custom_call.1} parent=1 // pred_region
      %32 = vsyncadd [#allocation8], 0
      %s33 = sshll.u32 %s2, 4
      %s34 = int_to_ptr.hbm [resolvable:$true] %s33
      %s35 = sshll.u32 [#allocation7], 4
      %s36 = int_to_ptr.vmem [resolvable:$true] %s35
      %41 = dma.hbm_to_vmem [thread:$0]  %s34, 4096, %s36, [#allocation8], 256, 256, 16
    $region9: #{tpu_custom_call.1} parent=1 // pred_fallthru
      _
    // Predicated region
    $region10: #{tpu_custom_call.1} parent=1 // pred_check
      _
    $region11: #{tpu_custom_call.1} parent=1 // pred_check_branch
      %43 = sbr.rel (0) target = $region13
    $region12: #{tpu_custom_call.1} parent=1 // pred_region
      %45 = vsyncadd [#allocation8], 0
      %s47 = sshll.u32 %s3, 4
      %s48 = int_to_ptr.hbm [resolvable:$true] %s47
      %s49 = sshll.u32 [#allocation9], 4
      %s50 = int_to_ptr.vmem [resolvable:$true] %s49
      %52 = dma.hbm_to_vmem [thread:$0]  %s48, 64, %s50, [#allocation8]
    $region13: #{tpu_custom_call.1} parent=1 // pred_fallthru
      _
    // Predicated region
    $region14: #{tpu_custom_call.1} parent=1 // pred_check
      _
    $region15: #{tpu_custom_call.1} parent=1 // pred_check_branch
      %54 = sbr.rel (0) target = $region17
    $region16: #{tpu_custom_call.1} parent=1 // pred_region
      %56 = vsyncadd [#allocation11], 0
      %s57 = sshll.u32 %s4, 4
      %s58 = int_to_ptr.hbm [resolvable:$true] %s57
      %s59 = sshll.u32 [#allocation10], 4
      %s60 = int_to_ptr.vmem [resolvable:$true] %s59
      %65 = dma.hbm_to_vmem [thread:$0]  %s58, 4096, %s60, [#allocation11], 64, 64, 4
    $region17: #{tpu_custom_call.1} parent=1 // pred_fallthru
      _
    // Predicated region
    $region18: #{tpu_custom_call.1} parent=1 // pred_check
      _
    $region19: #{tpu_custom_call.1} parent=1 // pred_check_branch
      %67 = sbr.rel (0) target = $region21
    $region20: #{tpu_custom_call.1} parent=1 // pred_region
      _
    $region21: #{tpu_custom_call.1} parent=1 // pred_fallthru
      _
    // Predicated region
    $region22: #{tpu_custom_call.1} parent=1 // pred_check
      _
    $region23: #{tpu_custom_call.1} parent=1 // pred_check_branch
      %69 = sbr.rel (0) target = $region25
    $region24: #{tpu_custom_call.1} parent=1 // pred_region
      %71 = dma.done [#allocation5], 256
    $region25: #{tpu_custom_call.1} parent=1 // pred_fallthru
      _
    // Predicated region
    $region26: #{tpu_custom_call.1} parent=1 // pred_check
      _
    $region27: #{tpu_custom_call.1} parent=1 // pred_check_branch
      %73 = sbr.rel (0) target = $region29
    $region28: #{tpu_custom_call.1} parent=1 // pred_region
      %75 = dma.done [#allocation8], 4096
    $region29: #{tpu_custom_call.1} parent=1 // pred_fallthru
      _
    // Predicated region
    $region30: #{tpu_custom_call.1} parent=1 // pred_check
      _
    $region31: #{tpu_custom_call.1} parent=1 // pred_check_branch
      %77 = sbr.rel (0) target = $region33
    $region32: #{tpu_custom_call.1} parent=1 // pred_region
      %79 = dma.done [#allocation8], 64
    $region33: #{tpu_custom_call.1} parent=1 // pred_fallthru
      _
    // Predicated region
    $region34: #{tpu_custom_call.1} parent=1 // pred_check
      _
    $region35: #{tpu_custom_call.1} parent=1 // pred_check_branch
      %81 = sbr.rel (0) target = $region37
    $region36: #{tpu_custom_call.1} parent=1 // pred_region
      %83 = dma.done [#allocation11], 4096
    $region37: #{tpu_custom_call.1} parent=1 // pred_fallthru
      _
    %v84 = vld [vmem:[#allocation4] sm:$0xff]
    %v85 = vld [vmem:[#allocation4 + $0x8] sm:$0xff]
    %v86 = vpack.c.bf16 %v85, %v84
    %v87 = vld [vmem:[#allocation7] sm:$0xff]
    %v88 = vld [vmem:[#allocation7 + $0x8] sm:$0xff]
    %v89 = vld [vmem:[#allocation7 + $0x10] sm:$0xff]
    %v90 = vld [vmem:[#allocation7 + $0x18] sm:$0xff]
    %v91 = vld [vmem:[#allocation7 + $0x20] sm:$0xff]
    %v92 = vld [vmem:[#allocation7 + $0x28] sm:$0xff]
    %v93 = vld [vmem:[#allocation7 + $0x30] sm:$0xff]
    %v94 = vld [vmem:[#allocation7 + $0x38] sm:$0xff]
    %v95 = vld [vmem:[#allocation7 + $0x40] sm:$0xff]
    %v96 = vld [vmem:[#allocation7 + $0x48] sm:$0xff]
    %v97 = vld [vmem:[#allocation7 + $0x50] sm:$0xff]
    %v98 = vld [vmem:[#allocation7 + $0x58] sm:$0xff]
    %v99 = vld [vmem:[#allocation7 + $0x60] sm:$0xff]
    %v100 = vld [vmem:[#allocation7 + $0x68] sm:$0xff]
    %v101 = vld [vmem:[#allocation7 + $0x70] sm:$0xff]
    %v102 = vld [vmem:[#allocation7 + $0x78] sm:$0xff]
    %v103 = vld [vmem:[#allocation7 + $0x80] sm:$0xff]
    %v104 = vld [vmem:[#allocation7 + $0x88] sm:$0xff]
    %v105 = vld [vmem:[#allocation7 + $0x90] sm:$0xff]
    %v106 = vld [vmem:[#allocation7 + $0x98] sm:$0xff]
    %v107 = vld [vmem:[#allocation7 + $0xa0] sm:$0xff]
    %v108 = vld [vmem:[#allocation7 + $0xa8] sm:$0xff]
    %v109 = vld [vmem:[#allocation7 + $0xb0] sm:$0xff]
    %v110 = vld [vmem:[#allocation7 + $0xb8] sm:$0xff]
    %v111 = vld [vmem:[#allocation7 + $0xc0] sm:$0xff]
    %v112 = vld [vmem:[#allocation7 + $0xc8] sm:$0xff]
    %v113 = vld [vmem:[#allocation7 + $0xd0] sm:$0xff]
    %v114 = vld [vmem:[#allocation7 + $0xd8] sm:$0xff]
    %v115 = vld [vmem:[#allocation7 + $0xe0] sm:$0xff]
    %v116 = vld [vmem:[#allocation7 + $0xe8] sm:$0xff]
    %v117 = vld [vmem:[#allocation7 + $0xf0] sm:$0xff]
    %v118 = vld [vmem:[#allocation7 + $0xf8] sm:$0xff]
    %v119 = vld [vmem:[#allocation9] sm:$0xf]
    %v121 = vperm.slane %v119, 0
    %v122 = vperm.slane %v119, 1
    %v123 = vperm.slane %v119, 2
    %v124 = vperm.slane %v119, 3
    %v161 = vunpack.c.l.b16 %v87
    %v162 = vunpack.c.h.b16 %v87
    %v163 = vunpack.c.l.b16 %v88
    %v164 = vunpack.c.h.b16 %v88
    %v165 = vunpack.c.l.b16 %v89
    %v166 = vunpack.c.h.b16 %v89
    %v167 = vunpack.c.l.b16 %v90
    %v168 = vunpack.c.h.b16 %v90
    %v169 = vunpack.c.l.b16 %v91
    %v170 = vunpack.c.h.b16 %v91
    %v171 = vunpack.c.l.b16 %v92
    %v172 = vunpack.c.h.b16 %v92
    %v173 = vunpack.c.l.b16 %v93
    %v174 = vunpack.c.h.b16 %v93
    %v175 = vunpack.c.l.b16 %v94
    %v176 = vunpack.c.h.b16 %v94
    %v177 = vunpack.c.l.b16 %v95
    %v178 = vunpack.c.h.b16 %v95
    %v179 = vunpack.c.l.b16 %v96
    %v180 = vunpack.c.h.b16 %v96
    %v181 = vunpack.c.l.b16 %v97
    %v182 = vunpack.c.h.b16 %v97
    %v183 = vunpack.c.l.b16 %v98
    %v184 = vunpack.c.h.b16 %v98
    %v185 = vunpack.c.l.b16 %v99
    %v186 = vunpack.c.h.b16 %v99
    %v187 = vunpack.c.l.b16 %v100
    %v188 = vunpack.c.h.b16 %v100
    %v189 = vunpack.c.l.b16 %v101
    %v190 = vunpack.c.h.b16 %v101
    %v191 = vunpack.c.l.b16 %v102
    %v192 = vunpack.c.h.b16 %v102
    %v193 = vunpack.c.l.b16 %v103
    %v194 = vunpack.c.h.b16 %v103
    %v195 = vunpack.c.l.b16 %v104
    %v196 = vunpack.c.h.b16 %v104
    %v197 = vunpack.c.l.b16 %v105
    %v198 = vunpack.c.h.b16 %v105
    %v199 = vunpack.c.l.b16 %v106
    %v200 = vunpack.c.h.b16 %v106
    %v201 = vunpack.c.l.b16 %v107
    %v202 = vunpack.c.h.b16 %v107
    %v203 = vunpack.c.l.b16 %v108
    %v204 = vunpack.c.h.b16 %v108
    %v205 = vunpack.c.l.b16 %v109
    %v206 = vunpack.c.h.b16 %v109
    %v207 = vunpack.c.l.b16 %v110
    %v208 = vunpack.c.h.b16 %v110
    %v209 = vunpack.c.l.b16 %v111
    %v210 = vunpack.c.h.b16 %v111
    %v211 = vunpack.c.l.b16 %v112
    %v212 = vunpack.c.h.b16 %v112
    %v213 = vunpack.c.l.b16 %v113
    %v214 = vunpack.c.h.b16 %v113
    %v215 = vunpack.c.l.b16 %v114
    %v216 = vunpack.c.h.b16 %v114
    %v217 = vunpack.c.l.b16 %v115
    %v218 = vunpack.c.h.b16 %v115
    %v219 = vunpack.c.l.b16 %v116
    %v220 = vunpack.c.h.b16 %v116
    %v221 = vunpack.c.l.b16 %v117
    %v222 = vunpack.c.h.b16 %v117
    %v223 = vunpack.c.l.b16 %v118
    %v224 = vunpack.c.h.b16 %v118
    %v225 = vpack.c.b16 %v165, %v161
    %v226 = vpack.c.b16 %v166, %v162
    %v227 = vpack.c.b16 %v167, %v163
    %v228 = vpack.c.b16 %v168, %v164
    %v229 = vpack.c.b16 %v173, %v169
    %v230 = vpack.c.b16 %v174, %v170
    %v231 = vpack.c.b16 %v175, %v171
    %v232 = vpack.c.b16 %v176, %v172
    %v233 = vpack.c.b16 %v181, %v177
    %v234 = vpack.c.b16 %v182, %v178
    %v235 = vpack.c.b16 %v183, %v179
    %v236 = vpack.c.b16 %v184, %v180
    %v237 = vpack.c.b16 %v189, %v185
    %v238 = vpack.c.b16 %v190, %v186
    %v239 = vpack.c.b16 %v191, %v187
    %v240 = vpack.c.b16 %v192, %v188
    %v241 = vpack.c.b16 %v197, %v193
    %v242 = vpack.c.b16 %v198, %v194
    %v243 = vpack.c.b16 %v199, %v195
    %v244 = vpack.c.b16 %v200, %v196
    %v245 = vpack.c.b16 %v205, %v201
    %v246 = vpack.c.b16 %v206, %v202
    %v247 = vpack.c.b16 %v207, %v203
    %v248 = vpack.c.b16 %v208, %v204
    %v249 = vpack.c.b16 %v213, %v209
    %v250 = vpack.c.b16 %v214, %v210
    %v251 = vpack.c.b16 %v215, %v211
    %v252 = vpack.c.b16 %v216, %v212
    %v253 = vpack.c.b16 %v221, %v217
    %v254 = vpack.c.b16 %v222, %v218
    %v255 = vpack.c.b16 %v223, %v219
    %v256 = vpack.c.b16 %v224, %v220
    %289 = vmatpush.bf16.msra.mxu0 %v253
    %290 = vmatpush.bf16.msra.mxu0 %v249
    %291 = vmatpush.bf16.msra.mxu0 %v245
    %292 = vmatpush.bf16.msra.mxu0 %v241
    %293 = vmatpush.bf16.msra.mxu0 %v237
    %294 = vmatpush.bf16.msra.mxu0 %v233
    %295 = vmatpush.bf16.msra.mxu0 %v229
    %296 = vmatpush.bf16.msra.mxu0 %v225
    %297 = vmatmul.bf16.gmra.mxu0 %v86
    %v298 = vpop.f32.mrf.mxu0
    %v299 = vadd.f32 %v121, %v298
    %v300 = vpop.f32.mrf.mxu0
    %v301 = vadd.f32 %v121, %v300
    %302 = vdwg.mxu0
    %303 = vmatpush.bf16.msra.mxu0 %v254
    %304 = vmatpush.bf16.msra.mxu0 %v250
    %305 = vmatpush.bf16.msra.mxu0 %v246
    %306 = vmatpush.bf16.msra.mxu0 %v242
    %307 = vmatpush.bf16.msra.mxu0 %v238
    %308 = vmatpush.bf16.msra.mxu0 %v234
    %309 = vmatpush.bf16.msra.mxu0 %v230
    %310 = vmatpush.bf16.msra.mxu0 %v226
    %311 = vmatmul.bf16.gmra.mxu0 %v86
    %v312 = vpop.f32.mrf.mxu0
    %v313 = vadd.f32 %v122, %v312
    %v314 = vpop.f32.mrf.mxu0
    %v315 = vadd.f32 %v122, %v314
    %316 = vdwg.mxu0
    %317 = vmatpush.bf16.msra.mxu0 %v255
    %318 = vmatpush.bf16.msra.mxu0 %v251
    %319 = vmatpush.bf16.msra.mxu0 %v247
    %320 = vmatpush.bf16.msra.mxu0 %v243
    %321 = vmatpush.bf16.msra.mxu0 %v239
    %322 = vmatpush.bf16.msra.mxu0 %v235
    %323 = vmatpush.bf16.msra.mxu0 %v231
    %324 = vmatpush.bf16.msra.mxu0 %v227
    %325 = vmatmul.bf16.gmra.mxu0 %v86
    %v326 = vpop.f32.mrf.mxu0
    %v327 = vadd.f32 %v123, %v326
    %v328 = vpop.f32.mrf.mxu0
    %v329 = vadd.f32 %v123, %v328
    %330 = vdwg.mxu0
    %331 = vmatpush.bf16.msra.mxu0 %v256
    %332 = vmatpush.bf16.msra.mxu0 %v252
    %333 = vmatpush.bf16.msra.mxu0 %v248
    %334 = vmatpush.bf16.msra.mxu0 %v244
    %335 = vmatpush.bf16.msra.mxu0 %v240
    %336 = vmatpush.bf16.msra.mxu0 %v236
    %337 = vmatpush.bf16.msra.mxu0 %v232
    %338 = vmatpush.bf16.msra.mxu0 %v228
    %339 = vmatmul.bf16.gmra.mxu0 %v86
    %v340 = vpop.f32.mrf.mxu0
    %v341 = vadd.f32 %v124, %v340
    %v342 = vpop.f32.mrf.mxu0
    %v343 = vadd.f32 %v124, %v342
    %344 = vdwg.mxu0
    %v345 = vmax.f32 %v299, 0.0
    %v346 = vmax.f32 %v313, 0.0
    %v347 = vmax.f32 %v327, 0.0
    %v348 = vmax.f32 %v341, 0.0
    %v349 = vmax.f32 %v301, 0.0
    %v350 = vmax.f32 %v315, 0.0
    %v351 = vmax.f32 %v329, 0.0
    %v352 = vmax.f32 %v343, 0.0
    %v353 = vpack.c.bf16 %v349, %v345
    %v354 = vpack.c.bf16 %v350, %v346
    %v355 = vpack.c.bf16 %v351, %v347
    %v356 = vpack.c.bf16 %v352, %v348
    %v357 = vld [vmem:[#allocation10] sm:$0xf]
    %v358 = vld [vmem:[#allocation10 + $0x4] sm:$0xf]
    %v359 = vld [vmem:[#allocation10 + $0x8] sm:$0xf]
    %v360 = vld [vmem:[#allocation10 + $0xc] sm:$0xf]
    %v361 = vld [vmem:[#allocation10 + $0x10] sm:$0xf]
    %v362 = vld [vmem:[#allocation10 + $0x14] sm:$0xf]
    %v363 = vld [vmem:[#allocation10 + $0x18] sm:$0xf]
    %v364 = vld [vmem:[#allocation10 + $0x1c] sm:$0xf]
    %v365 = vld [vmem:[#allocation10 + $0x20] sm:$0xf]
    %v366 = vld [vmem:[#allocation10 + $0x24] sm:$0xf]
    %v367 = vld [vmem:[#allocation10 + $0x28] sm:$0xf]
    %v368 = vld [vmem:[#allocation10 + $0x2c] sm:$0xf]
    %v369 = vld [vmem:[#allocation10 + $0x30] sm:$0xf]
    %v370 = vld [vmem:[#allocation10 + $0x34] sm:$0xf]
    %v371 = vld [vmem:[#allocation10 + $0x38] sm:$0xf]
    %v372 = vld [vmem:[#allocation10 + $0x3c] sm:$0xf]
    %v373 = vld [vmem:[#allocation10 + $0x40] sm:$0xf]
    %v374 = vld [vmem:[#allocation10 + $0x44] sm:$0xf]
    %v375 = vld [vmem:[#allocation10 + $0x48] sm:$0xf]
    %v376 = vld [vmem:[#allocation10 + $0x4c] sm:$0xf]
    %v377 = vld [vmem:[#allocation10 + $0x50] sm:$0xf]
    %v378 = vld [vmem:[#allocation10 + $0x54] sm:$0xf]
    %v379 = vld [vmem:[#allocation10 + $0x58] sm:$0xf]
    %v380 = vld [vmem:[#allocation10 + $0x5c] sm:$0xf]
    %v381 = vld [vmem:[#allocation10 + $0x60] sm:$0xf]
    %v382 = vld [vmem:[#allocation10 + $0x64] sm:$0xf]
    %v383 = vld [vmem:[#allocation10 + $0x68] sm:$0xf]
    %v384 = vld [vmem:[#allocation10 + $0x6c] sm:$0xf]
    %v385 = vld [vmem:[#allocation10 + $0x70] sm:$0xf]
    %v386 = vld [vmem:[#allocation10 + $0x74] sm:$0xf]
    %v387 = vld [vmem:[#allocation10 + $0x78] sm:$0xf]
    %v388 = vld [vmem:[#allocation10 + $0x7c] sm:$0xf]
    %v389 = vld [vmem:[#allocation10 + $0x80] sm:$0xf]
    %v390 = vld [vmem:[#allocation10 + $0x84] sm:$0xf]
    %v391 = vld [vmem:[#allocation10 + $0x88] sm:$0xf]
    %v392 = vld [vmem:[#allocation10 + $0x8c] sm:$0xf]
    %v393 = vld [vmem:[#allocation10 + $0x90] sm:$0xf]
    %v394 = vld [vmem:[#allocation10 + $0x94] sm:$0xf]
    %v395 = vld [vmem:[#allocation10 + $0x98] sm:$0xf]
    %v396 = vld [vmem:[#allocation10 + $0x9c] sm:$0xf]
    %v397 = vld [vmem:[#allocation10 + $0xa0] sm:$0xf]
    %v398 = vld [vmem:[#allocation10 + $0xa4] sm:$0xf]
    %v399 = vld [vmem:[#allocation10 + $0xa8] sm:$0xf]
    %v400 = vld [vmem:[#allocation10 + $0xac] sm:$0xf]
    %v401 = vld [vmem:[#allocation10 + $0xb0] sm:$0xf]
    %v402 = vld [vmem:[#allocation10 + $0xb4] sm:$0xf]
    %v403 = vld [vmem:[#allocation10 + $0xb8] sm:$0xf]
    %v404 = vld [vmem:[#allocation10 + $0xbc] sm:$0xf]
    %v405 = vld [vmem:[#allocation10 + $0xc0] sm:$0xf]
    %v406 = vld [vmem:[#allocation10 + $0xc4] sm:$0xf]
    %v407 = vld [vmem:[#allocation10 + $0xc8] sm:$0xf]
    %v408 = vld [vmem:[#allocation10 + $0xcc] sm:$0xf]
    %v409 = vld [vmem:[#allocation10 + $0xd0] sm:$0xf]
    %v410 = vld [vmem:[#allocation10 + $0xd4] sm:$0xf]
    %v411 = vld [vmem:[#allocation10 + $0xd8] sm:$0xf]
    %v412 = vld [vmem:[#allocation10 + $0xdc] sm:$0xf]
    %v413 = vld [vmem:[#allocation10 + $0xe0] sm:$0xf]
    %v414 = vld [vmem:[#allocation10 + $0xe4] sm:$0xf]
    %v415 = vld [vmem:[#allocation10 + $0xe8] sm:$0xf]
    %v416 = vld [vmem:[#allocation10 + $0xec] sm:$0xf]
    %v417 = vld [vmem:[#allocation10 + $0xf0] sm:$0xf]
    %v418 = vld [vmem:[#allocation10 + $0xf4] sm:$0xf]
    %v419 = vld [vmem:[#allocation10 + $0xf8] sm:$0xf]
    %v420 = vld [vmem:[#allocation10 + $0xfc] sm:$0xf]
    %v421 = vld [vmem:[%s5] sm:$0x1]
    %v423 = vperm.slane %v421, 0
    %v489 = vunpack.c.l.b16 %v357
    %v490 = vunpack.c.l.b16 %v358
    %v491 = vunpack.c.l.b16 %v359
    %v492 = vunpack.c.l.b16 %v360
    %v493 = vunpack.c.l.b16 %v361
    %v494 = vunpack.c.l.b16 %v362
    %v495 = vunpack.c.l.b16 %v363
    %v496 = vunpack.c.l.b16 %v364
    %v497 = vunpack.c.l.b16 %v365
    %v498 = vunpack.c.l.b16 %v366
    %v499 = vunpack.c.l.b16 %v367
    %v500 = vunpack.c.l.b16 %v368
    %v501 = vunpack.c.l.b16 %v369
    %v502 = vunpack.c.l.b16 %v370
    %v503 = vunpack.c.l.b16 %v371
    %v504 = vunpack.c.l.b16 %v372
    %v505 = vunpack.c.l.b16 %v373
    %v506 = vunpack.c.l.b16 %v374
    %v507 = vunpack.c.l.b16 %v375
    %v508 = vunpack.c.l.b16 %v376
    %v509 = vunpack.c.l.b16 %v377
    %v510 = vunpack.c.l.b16 %v378
    %v511 = vunpack.c.l.b16 %v379
    %v512 = vunpack.c.l.b16 %v380
    %v513 = vunpack.c.l.b16 %v381
    %v514 = vunpack.c.l.b16 %v382
    %v515 = vunpack.c.l.b16 %v383
    %v516 = vunpack.c.l.b16 %v384
    %v517 = vunpack.c.l.b16 %v385
    %v518 = vunpack.c.l.b16 %v386
    %v519 = vunpack.c.l.b16 %v387
    %v520 = vunpack.c.l.b16 %v388
    %v521 = vunpack.c.l.b16 %v389
    %v522 = vunpack.c.l.b16 %v390
    %v523 = vunpack.c.l.b16 %v391
    %v524 = vunpack.c.l.b16 %v392
    %v525 = vunpack.c.l.b16 %v393
    %v526 = vunpack.c.l.b16 %v394
    %v527 = vunpack.c.l.b16 %v395
    %v528 = vunpack.c.l.b16 %v396
    %v529 = vunpack.c.l.b16 %v397
    %v530 = vunpack.c.l.b16 %v398
    %v531 = vunpack.c.l.b16 %v399
    %v532 = vunpack.c.l.b16 %v400
    %v533 = vunpack.c.l.b16 %v401
    %v534 = vunpack.c.l.b16 %v402
    %v535 = vunpack.c.l.b16 %v403
    %v536 = vunpack.c.l.b16 %v404
    %v537 = vunpack.c.l.b16 %v405
    %v538 = vunpack.c.l.b16 %v406
    %v539 = vunpack.c.l.b16 %v407
    %v540 = vunpack.c.l.b16 %v408
    %v541 = vunpack.c.l.b16 %v409
    %v542 = vunpack.c.l.b16 %v410
    %v543 = vunpack.c.l.b16 %v411
    %v544 = vunpack.c.l.b16 %v412
    %v545 = vunpack.c.l.b16 %v413
    %v546 = vunpack.c.l.b16 %v414
    %v547 = vunpack.c.l.b16 %v415
    %v548 = vunpack.c.l.b16 %v416
    %v549 = vunpack.c.l.b16 %v417
    %v550 = vunpack.c.l.b16 %v418
    %v551 = vunpack.c.l.b16 %v419
    %v552 = vunpack.c.l.b16 %v420
    %v553 = vpack.c.b16 %v490, %v489
    %v554 = vpack.c.b16 %v492, %v491
    %v555 = vpack.c.b16 %v494, %v493
    %v556 = vpack.c.b16 %v496, %v495
    %v557 = vpack.c.b16 %v498, %v497
    %v558 = vpack.c.b16 %v500, %v499
    %v559 = vpack.c.b16 %v502, %v501
    %v560 = vpack.c.b16 %v504, %v503
    %v561 = vpack.c.b16 %v506, %v505
    %v562 = vpack.c.b16 %v508, %v507
    %v563 = vpack.c.b16 %v510, %v509
    %v564 = vpack.c.b16 %v512, %v511
    %v565 = vpack.c.b16 %v514, %v513
    %v566 = vpack.c.b16 %v516, %v515
    %v567 = vpack.c.b16 %v518, %v517
    %v568 = vpack.c.b16 %v520, %v519
    %v569 = vpack.c.b16 %v522, %v521
    %v570 = vpack.c.b16 %v524, %v523
    %v571 = vpack.c.b16 %v526, %v525
    %v572 = vpack.c.b16 %v528, %v527
    %v573 = vpack.c.b16 %v530, %v529
    %v574 = vpack.c.b16 %v532, %v531
    %v575 = vpack.c.b16 %v534, %v533
    %v576 = vpack.c.b16 %v536, %v535
    %v577 = vpack.c.b16 %v538, %v537
    %v578 = vpack.c.b16 %v540, %v539
    %v579 = vpack.c.b16 %v542, %v541
    %v580 = vpack.c.b16 %v544, %v543
    %v581 = vpack.c.b16 %v546, %v545
    %v582 = vpack.c.b16 %v548, %v547
    %v583 = vpack.c.b16 %v550, %v549
    %v584 = vpack.c.b16 %v552, %v551
    %617 = vmatpush.bf16.msra.mxu0 %v560
    %618 = vmatpush.bf16.msra.mxu0 %v559
    %619 = vmatpush.bf16.msra.mxu0 %v558
    %620 = vmatpush.bf16.msra.mxu0 %v557
    %621 = vmatpush.bf16.msra.mxu0 %v556
    %622 = vmatpush.bf16.msra.mxu0 %v555
    %623 = vmatpush.bf16.msra.mxu0 %v554
    %624 = vmatpush.bf16.msra.mxu0 %v553
    %625 = vmatmul.bf16.gmra.mxu0 %v353
    %v626 = vpop.f32.mrf.mxu0
    %v627 = vadd.f32 %v423, %v626
    %v628 = vpop.f32.mrf.mxu0
    %v629 = vadd.f32 %v423, %v628
    %630 = vdwg.mxu0
    %631 = vmatpush.bf16.msra.mxu0 %v568
    %632 = vmatpush.bf16.msra.mxu0 %v567
    %633 = vmatpush.bf16.msra.mxu0 %v566
    %634 = vmatpush.bf16.msra.mxu0 %v565
    %635 = vmatpush.bf16.msra.mxu0 %v564
    %636 = vmatpush.bf16.msra.mxu0 %v563
    %637 = vmatpush.bf16.msra.mxu0 %v562
    %638 = vmatpush.bf16.msra.mxu0 %v561
    %639 = vmatmul.bf16.gmra.mxu0 %v354
    %v640 = vpop.f32.mrf.mxu0
    %v641 = vadd.f32 %v627, %v640
    %v642 = vpop.f32.mrf.mxu0
    %v643 = vadd.f32 %v629, %v642
    %644 = vdwg.mxu0
    %645 = vmatpush.bf16.msra.mxu0 %v576
    %646 = vmatpush.bf16.msra.mxu0 %v575
    %647 = vmatpush.bf16.msra.mxu0 %v574
    %648 = vmatpush.bf16.msra.mxu0 %v573
    %649 = vmatpush.bf16.msra.mxu0 %v572
    %650 = vmatpush.bf16.msra.mxu0 %v571
    %651 = vmatpush.bf16.msra.mxu0 %v570
    %652 = vmatpush.bf16.msra.mxu0 %v569
    %653 = vmatmul.bf16.gmra.mxu0 %v355
    %v654 = vpop.f32.mrf.mxu0
    %v655 = vadd.f32 %v641, %v654
    %v656 = vpop.f32.mrf.mxu0
    %v657 = vadd.f32 %v643, %v656
    %658 = vdwg.mxu0
    %659 = vmatpush.bf16.msra.mxu0 %v584
    %660 = vmatpush.bf16.msra.mxu0 %v583
    %661 = vmatpush.bf16.msra.mxu0 %v582
    %662 = vmatpush.bf16.msra.mxu0 %v581
    %663 = vmatpush.bf16.msra.mxu0 %v580
    %664 = vmatpush.bf16.msra.mxu0 %v579
    %665 = vmatpush.bf16.msra.mxu0 %v578
    %666 = vmatpush.bf16.msra.mxu0 %v577
    %667 = vmatmul.bf16.gmra.mxu0 %v356
    %v668 = vpop.f32.mrf.mxu0
    %v669 = vadd.f32 %v655, %v668
    %v670 = vpop.f32.mrf.mxu0
    %v671 = vadd.f32 %v657, %v670
    %672 = vdwg.mxu0
    %673 = vst [vmem:[#allocation12] sm:$0xff] %v669
    %674 = vst [vmem:[#allocation12 + $0x8] sm:$0xff] %v671
    // Predicated region
    $region38: #{tpu_custom_call.1} parent=1 // pred_check
      _
    $region39: #{tpu_custom_call.1} parent=1 // pred_check_branch
      %676 = sbr.rel (0) target = $region41
    $region40: #{tpu_custom_call.1} parent=1 // pred_region
      %678 = vsyncadd [#allocation6], 0
      %s679 = sshll.u32 [#allocation12], 4
      %s680 = int_to_ptr.vmem [resolvable:$true] %s679
      %s681 = sshll.u32 %s6, 4
      %s682 = int_to_ptr.hbm [resolvable:$true] %s681
      %687 = dma.vmem_to_hbm [thread:$0]  %s680, 256, %s682, [#allocation6], 128, 128, 8
    $region41: #{tpu_custom_call.1} parent=1 // pred_fallthru
      _
    // Predicated region
    $region42: #{tpu_custom_call.1} parent=1 // pred_check
      _
    $region43: #{tpu_custom_call.1} parent=1 // pred_check_branch
      %689 = sbr.rel (0) target = $region45
    $region44: #{tpu_custom_call.1} parent=1 // pred_region
      %691 = dma.done [#allocation6], 256
    $region45: #{tpu_custom_call.1} parent=1 // pred_fallthru
      _
    %692 = vsyncpa [#allocation5], 1
    %693 = vsyncpa [#allocation8], 1
    %694 = vsyncpa [#allocation11], 1
    %695 = vsyncpa [#allocation6], 1

</llo_original>
